<compile_context>
chip_gen: v6e
topology: v6e:2x2x1
jax: 0.10.0
libtpu: 0.0.40
codegen_flags: <defaults>
</compile_context>

<pallas_src>
import jax
import jax.numpy as jnp
from jax.experimental import pallas as pl
from jax.experimental.pallas import tpu as pltpu


def _round_up(x, m):
    return ((x + m - 1) // m) * m


# ----------------------------------------------------------------------------
# Pallas kernel: fused 3-layer MLP  (Linear+ReLU, Linear+ReLU, Linear)
# ----------------------------------------------------------------------------
def discriminator_kernel(x_ref, w1_ref, b1_ref, w2_ref, b2_ref, w3_ref, b3_ref,
                         o_ref):
    # Layer 1: the bandwidth-dominant matmul.  x arrives as f32 straight from
    # HBM (no separate wrapper-side cast pass); cast to the bf16 weight dtype
    # right at the MXU input, accumulate in f32.
    x = x_ref[...].astype(w1_ref.dtype)
    h1 = jnp.dot(x, w1_ref[...], preferred_element_type=jnp.float32)
    h1 = jnp.maximum(h1 + b1_ref[...], 0.0)          # bias + ReLU in f32 (VPU)

    # Layers 2/3 are tiny (<=256 lanes): cast only the matmul operand so the
    # MXU stays on its bf16 path; elementwise stays in f32.
    h2 = jnp.dot(h1.astype(w2_ref.dtype), w2_ref[...],
                 preferred_element_type=jnp.float32)
    h2 = jnp.maximum(h2 + b2_ref[...], 0.0)

    out = jnp.dot(h2.astype(w3_ref.dtype), w3_ref[...],
                  preferred_element_type=jnp.float32)
    o_ref[...] = (out + b3_ref[...]).astype(o_ref.dtype)


# ----------------------------------------------------------------------------
# Wrapper
# ----------------------------------------------------------------------------
def discriminator_forward(x, params, *, batch_tile=None):
    """x: [B, n_features] float32.  params: dict from make_discriminator_params.

    Weights wK are [in, out] (bf16, lane-padded); biases bK are [1, out] (f32).
    Returns [B, out_dim] float32."""
    B, n_features = x.shape
    h2_dim = params["w1"].shape[1]
    h_dim = params["w2"].shape[1]
    out_pad = params["w3"].shape[1]        # lane-padded output width (mult of 128)
    out_dim = params["out_dim"]            # logical output width

    # ---- batch tiling ------------------------------------------------------
    # Aim for >= 4 grid steps (>= 2 per v7x TensorCore so the x DMA keeps
    # double-buffering on each core), cap tiles at 512 rows (~85% of the
    # measured HBM roofline), and keep the f32 x double-buffer under ~32 MiB
    # so it also fits v7x's 64 MiB VMEM with headroom for the resident
    # weights.  (v5e/v6e have 128 MiB VMEM and could take 1024-row tiles, but
    # the gain past 512 is ~1%, not worth a per-chip code path.)
    if batch_tile is None:
        vmem_rows = (32 * 1024 * 1024) // (2 * 4 * n_features)
        batch_tile = min(512, max(16, vmem_rows), max(16, pl.cdiv(B, 4)))
    tb = _round_up(max(16, batch_tile), 16)   # 16-row multiples (bf16 packing)

    grid = (pl.cdiv(B, tb),)                  # ragged last block handled by Pallas

    # Grid-invariant operands: constant index_map -> fetched once, resident in
    # VMEM.  Single-buffered (pl.Buffered(1)) so the dead second buffer
    # (~1.75 MiB for a 7000-gene bf16 w1) is spent on the x tile instead.
    def const(shape):
        return pl.BlockSpec(shape, lambda i: (0, 0),
                            pipeline_mode=pl.Buffered(1))

    out = pl.pallas_call(
        discriminator_kernel,
        out_shape=jax.ShapeDtypeStruct((B, out_pad), jnp.float32),
        grid=grid,
        in_specs=[
            pl.BlockSpec((tb, n_features), lambda i: (i, 0)),  # x (streamed)
            const((n_features, h2_dim)),                       # w1
            const((1, h2_dim)),                                # b1
            const((h2_dim, h_dim)),                            # w2
            const((1, h_dim)),                                 # b2
            const((h_dim, out_pad)),                           # w3
            const((1, out_pad)),                               # b3
        ],
        out_specs=pl.BlockSpec((tb, out_pad), lambda i: (i, 0)),
        compiler_params=pltpu.CompilerParams(
            dimension_semantics=("parallel",),
            # Headroom below v7x's 64 MiB physical VMEM; the 512-row f32 x
            # tile double-buffers at ~28 MiB for ~7000 features.
            vmem_limit_bytes=48 * 1024 * 1024,
        ),
    )(x, params["w1"], params["b1"], params["w2"], params["b2"],
      params["w3"], params["b3"])

    # Only the lane padding of the output is sliced; the batch is written
    # exactly (masked writeback of the ragged last block).
    return out[:, :out_dim]


# ----------------------------------------------------------------------------
# Parameter setup (plain JAX glue)
# ----------------------------------------------------------------------------
def _linear_init(key, fan_in, fan_out):
    """PyTorch nn.Linear default init, deterministic.  Weight is [out, in]."""
    kw, kb = jax.random.split(key)
    bound = 1.0 / jnp.sqrt(fan_in)
    w = jax.random.uniform(kw, (fan_out, fan_in), jnp.float32, -bound, bound)
    b = jax.random.uniform(kb, (fan_out,), jnp.float32, -bound, bound)
    return w, b


def _spectral_norm(key, w, n_power_iterations=1, eps=1e-12):
    """Mimic torch.nn.utils.spectral_norm: W / sigma, sigma via power iter."""
    out_dim = w.shape[0]
    u = jax.random.normal(key, (out_dim,), jnp.float32)
    u = u / jnp.maximum(jnp.linalg.norm(u), eps)
    v = None
    for _ in range(n_power_iterations):
        v = w.T @ u
        v = v / jnp.maximum(jnp.linalg.norm(v), eps)
        u = w @ v
        u = u / jnp.maximum(jnp.linalg.norm(u), eps)
    sigma = u @ (w @ v)
    return w / sigma


def make_discriminator_params(key, n_features, min_hidden_size, out_dim,
                              param_dtype=jnp.bfloat16):
    k1, k2, k3, ku1, ku2 = jax.random.split(key, 5)
    h2 = min_hidden_size * 2

    w1, b1 = _linear_init(k1, n_features, h2)
    w2, b2 = _linear_init(k2, h2, min_hidden_size)
    w3, b3 = _linear_init(k3, min_hidden_size, out_dim)

    # spectral_norm on layer1 and layer2 weights only (matches the module).
    # TODO(synk): PyTorch re-runs the power iteration every training-mode
    # forward; here sigma is baked in once (inference semantics).
    w1 = _spectral_norm(ku1, w1)
    w2 = _spectral_norm(ku2, w2)

    # Transpose to [in, out]; zero-pad the hidden dims AND the output dim to
    # 128-lane multiples.  The padding is a mathematical no-op (zero columns
    # stay zero through bias=0 and ReLU; padded rows of the next weight are
    # zero) but keeps every matmul and the output store lane-dense.
    h2p = _round_up(h2, 128)
    hp = _round_up(min_hidden_size, 128)
    op = _round_up(out_dim, 128)

    w1p = jnp.zeros((n_features, h2p), jnp.float32).at[:, :h2].set(w1.T)
    b1p = jnp.zeros((1, h2p), jnp.float32).at[:, :h2].set(b1[None, :])
    w2p = jnp.zeros((h2p, hp), jnp.float32).at[:h2, :min_hidden_size].set(w2.T)
    b2p = jnp.zeros((1, hp), jnp.float32).at[:, :min_hidden_size].set(b2[None, :])
    w3p = jnp.zeros((hp, op), jnp.float32).at[:min_hidden_size, :out_dim].set(w3.T)
    b3p = jnp.zeros((1, op), jnp.float32).at[:, :out_dim].set(b3[None, :])

    return {
        "w1": w1p.astype(param_dtype), "b1": b1p,
        "w2": w2p.astype(param_dtype), "b2": b2p,
        "w3": w3p.astype(param_dtype), "b3": b3p,
        "out_dim": out_dim,
    }


def reference_forward(x, params):
    """Pure-JAX reference mirroring the kernel's precision choices."""
    f32 = jnp.float32
    wdt = params["w1"].dtype
    xc = x.astype(wdt).astype(f32)
    h1 = jnp.maximum(xc @ params["w1"].astype(f32) + params["b1"], 0.0)
    h1 = h1.astype(wdt).astype(f32)
    h2 = jnp.maximum(h1 @ params["w2"].astype(f32) + params["b2"], 0.0)
    h2 = h2.astype(wdt).astype(f32)
    out = h2 @ params["w3"].astype(f32) + params["b3"]
    return out[:, :params["out_dim"]]


# ----------------------------------------------------------------------------
if __name__ == "__main__":
    key = jax.random.PRNGKey(0)
    k_params, k_x, k_x2 = jax.random.split(key, 3)

    # Small, module-consistent shapes.
    batch = 64
    n_features = 256
    min_hidden_size = 32
    out_dim = 1

    params = make_discriminator_params(k_params, n_features,
                                       min_hidden_size, out_dim)
    x = jax.random.normal(k_x, (batch, n_features), jnp.float32)

    # Default tiling: tb=16 -> grid=(4,) (>=2 steps per v7x TC, pipelined).
    y = jax.block_until_ready(discriminator_forward(x, params))
    y_ref = reference_forward(x, params)
    assert y.shape == (batch, out_dim)
    assert jnp.allclose(y, y_ref, atol=1e-3, rtol=1e-3), "mismatch vs reference"

    # Uneven batch exercises the ragged-last-block path (50 = 3*16 + 2).
    x2 = jax.random.normal(k_x2, (50, n_features), jnp.float32)
    y2 = jax.block_until_ready(discriminator_forward(x2, params, batch_tile=16))
    assert y2.shape == (50, out_dim)
    assert jnp.allclose(y2, reference_forward(x2, params),
                        atol=1e-3, rtol=1e-3), "mismatch vs reference (ragged)"

    print("KERNEL_OK")
</pallas_src>

<mosaic_0001>
module attributes {stable_mosaic.version = 11 : i64} {
  func.func @discriminator_kernel(%arg0: i32, %arg1: memref<16x256xf32, #tpu.memory_space<vmem>>, %arg2: memref<256x128xbf16, #tpu.memory_space<vmem>>, %arg3: memref<1x128xf32, #tpu.memory_space<vmem>>, %arg4: memref<128x128xbf16, #tpu.memory_space<vmem>>, %arg5: memref<1x128xf32, #tpu.memory_space<vmem>>, %arg6: memref<128x128xbf16, #tpu.memory_space<vmem>>, %arg7: memref<1x128xf32, #tpu.memory_space<vmem>>, %arg8: memref<16x128xf32, #tpu.memory_space<vmem>>) attributes {dimension_semantics = [#tpu.dimension_semantics<parallel>], iteration_bounds = array<i64: 4>, scalar_prefetch = 0 : i64, scratch_operands = 0 : i64, tpu.core_type = #tpu.core_type<tc>, window_params = [{transform_indices = @transform_0, window_bounds = array<i64: 16, 256>}, {pipeline_mode = #tpu.pipeline_mode<synchronous>, transform_indices = @transform_1, window_bounds = array<i64: 256, 128>}, {pipeline_mode = #tpu.pipeline_mode<synchronous>, transform_indices = @transform_2, window_bounds = array<i64: 1, 128>}, {pipeline_mode = #tpu.pipeline_mode<synchronous>, transform_indices = @transform_3, window_bounds = array<i64: 128, 128>}, {pipeline_mode = #tpu.pipeline_mode<synchronous>, transform_indices = @transform_4, window_bounds = array<i64: 1, 128>}, {pipeline_mode = #tpu.pipeline_mode<synchronous>, transform_indices = @transform_5, window_bounds = array<i64: 128, 128>}, {pipeline_mode = #tpu.pipeline_mode<synchronous>, transform_indices = @transform_6, window_bounds = array<i64: 1, 128>}, {transform_indices = @transform_7, window_bounds = array<i64: 16, 128>}]} {
    %c0 = arith.constant 0 : index
    %c0_0 = arith.constant 0 : index
    %0 = vector.load %arg1[%c0, %c0_0] : memref<16x256xf32, #tpu.memory_space<vmem>>, vector<16x256xf32>
    %1 = arith.truncf %0 : vector<16x256xf32> to vector<16x256xbf16>
    %c0_1 = arith.constant 0 : index
    %c0_2 = arith.constant 0 : index
    %2 = vector.load %arg2[%c0_1, %c0_2] : memref<256x128xbf16, #tpu.memory_space<vmem>>, vector<256x128xbf16>
    %cst = arith.constant dense<0.000000e+00> : vector<16x128xf32>
    %3 = tpu.matmul %1, %2, %cst {dimension_numbers = #tpu.dot_dimension_numbers<[1], [0], [0], [1], [0, 0, 1, 1], [], []>} : vector<16x256xbf16>, vector<256x128xbf16>, vector<16x128xf32> -> vector<16x128xf32>
    %c0_3 = arith.constant 0 : index
    %c0_4 = arith.constant 0 : index
    %4 = vector.load %arg3[%c0_3, %c0_4] : memref<1x128xf32, #tpu.memory_space<vmem>>, vector<1x128xf32>
    %5 = vector.broadcast %4 : vector<1x128xf32> to vector<16x128xf32>
    %6 = arith.addf %3, %5 : vector<16x128xf32>
    %cst_5 = arith.constant 0.000000e+00 : f32
    %7 = vector.broadcast %cst_5 : f32 to vector<16x128xf32>
    %8 = arith.maximumf %6, %7 : vector<16x128xf32>
    %9 = arith.truncf %8 : vector<16x128xf32> to vector<16x128xbf16>
    %c0_6 = arith.constant 0 : index
    %c0_7 = arith.constant 0 : index
    %10 = vector.load %arg4[%c0_6, %c0_7] : memref<128x128xbf16, #tpu.memory_space<vmem>>, vector<128x128xbf16>
    %cst_8 = arith.constant dense<0.000000e+00> : vector<16x128xf32>
    %11 = tpu.matmul %9, %10, %cst_8 {dimension_numbers = #tpu.dot_dimension_numbers<[1], [0], [0], [1], [0, 0, 1, 1], [], []>} : vector<16x128xbf16>, vector<128x128xbf16>, vector<16x128xf32> -> vector<16x128xf32>
    %c0_9 = arith.constant 0 : index
    %c0_10 = arith.constant 0 : index
    %12 = vector.load %arg5[%c0_9, %c0_10] : memref<1x128xf32, #tpu.memory_space<vmem>>, vector<1x128xf32>
    %13 = vector.broadcast %12 : vector<1x128xf32> to vector<16x128xf32>
    %14 = arith.addf %11, %13 : vector<16x128xf32>
    %cst_11 = arith.constant 0.000000e+00 : f32
    %15 = vector.broadcast %cst_11 : f32 to vector<16x128xf32>
    %16 = arith.maximumf %14, %15 : vector<16x128xf32>
    %17 = arith.truncf %16 : vector<16x128xf32> to vector<16x128xbf16>
    %c0_12 = arith.constant 0 : index
    %c0_13 = arith.constant 0 : index
    %18 = vector.load %arg6[%c0_12, %c0_13] : memref<128x128xbf16, #tpu.memory_space<vmem>>, vector<128x128xbf16>
    %cst_14 = arith.constant dense<0.000000e+00> : vector<16x128xf32>
    %19 = tpu.matmul %17, %18, %cst_14 {dimension_numbers = #tpu.dot_dimension_numbers<[1], [0], [0], [1], [0, 0, 1, 1], [], []>} : vector<16x128xbf16>, vector<128x128xbf16>, vector<16x128xf32> -> vector<16x128xf32>
    %c0_15 = arith.constant 0 : index
    %c0_16 = arith.constant 0 : index
    %20 = vector.load %arg7[%c0_15, %c0_16] : memref<1x128xf32, #tpu.memory_space<vmem>>, vector<1x128xf32>
    %21 = vector.broadcast %20 : vector<1x128xf32> to vector<16x128xf32>
    %22 = arith.addf %19, %21 : vector<16x128xf32>
    %c0_17 = arith.constant 0 : index
    %c0_18 = arith.constant 0 : index
    %23 = vector.load %arg8[%c0_17, %c0_18] : memref<16x128xf32, #tpu.memory_space<vmem>>, vector<16x128xf32>
    tpu.vector_store %arg8[%c0_17, %c0_18], %22 {strides = array<i32>} : memref<16x128xf32, #tpu.memory_space<vmem>>, vector<16x128xf32>,
    return
  }
  func.func @transform_0(%arg0: i32) -> (i32, i32) {
    %c0_i32 = arith.constant 0 : i32
    %c0_i32_0 = arith.constant 0 : i32
    return %arg0, %c0_i32 : i32, i32
  }
  func.func @transform_1(%arg0: i32) -> (i32, i32) {
    %c0_i32 = arith.constant 0 : i32
    %c0_i32_0 = arith.constant 0 : i32
    %c0_i32_1 = arith.constant 0 : i32
    return %c0_i32, %c0_i32_0 : i32, i32
  }
  func.func @transform_2(%arg0: i32) -> (i32, i32) {
    %c0_i32 = arith.constant 0 : i32
    %c0_i32_0 = arith.constant 0 : i32
    %c0_i32_1 = arith.constant 0 : i32
    return %c0_i32, %c0_i32_0 : i32, i32
  }
  func.func @transform_3(%arg0: i32) -> (i32, i32) {
    %c0_i32 = arith.constant 0 : i32
    %c0_i32_0 = arith.constant 0 : i32
    %c0_i32_1 = arith.constant 0 : i32
    return %c0_i32, %c0_i32_0 : i32, i32
  }
  func.func @transform_4(%arg0: i32) -> (i32, i32) {
    %c0_i32 = arith.constant 0 : i32
    %c0_i32_0 = arith.constant 0 : i32
    %c0_i32_1 = arith.constant 0 : i32
    return %c0_i32, %c0_i32_0 : i32, i32
  }
  func.func @transform_5(%arg0: i32) -> (i32, i32) {
    %c0_i32 = arith.constant 0 : i32
    %c0_i32_0 = arith.constant 0 : i32
    %c0_i32_1 = arith.constant 0 : i32
    return %c0_i32, %c0_i32_0 : i32, i32
  }
  func.func @transform_6(%arg0: i32) -> (i32, i32) {
    %c0_i32 = arith.constant 0 : i32
    %c0_i32_0 = arith.constant 0 : i32
    %c0_i32_1 = arith.constant 0 : i32
    return %c0_i32, %c0_i32_0 : i32, i32
  }
  func.func @transform_7(%arg0: i32) -> (i32, i32) {
    %c0_i32 = arith.constant 0 : i32
    %c0_i32_0 = arith.constant 0 : i32
    return %arg0, %c0_i32 : i32, i32
  }
}

</mosaic_0001>

<llo_original>
// kernel: tpu_custom_call.1
$region0: #{tpu_custom_call.1}
  #allocation0 [shape = 'u32[]', space=smem, size = 0x4, offset = 0x4, fixed_abs, tag = 'smem constant byte address 0x4 - core index']
  #allocation1 [shape = 'u32[144,128]{1,0:T(1,128)}', space=vmem, size = 0x12000, scoped, tag = 'internal scratch']
  %s0 = inlined_call_operand.hbm [shape: f32[64,256], index: 0, kind: input, shape index: {}]
  %s1 = inlined_call_operand.hbm [shape: bf16[256,128], index: 1, kind: input, shape index: {}]
  %s2 = inlined_call_operand.vmem [shape: f32[1,128], index: 2, kind: input, shape index: {}]
  %s3 = inlined_call_operand.hbm [shape: bf16[128,128], index: 3, kind: input, shape index: {}]
  %s4 = inlined_call_operand.vmem [shape: f32[1,128], index: 4, kind: input, shape index: {}]
  %s5 = inlined_call_operand.hbm [shape: bf16[128,128], index: 5, kind: input, shape index: {}]
  %s6 = inlined_call_operand.vmem [shape: f32[1,128], index: 6, kind: input, shape index: {}]
  %s7 = inlined_call_operand.hbm [shape: f32[64,128], index: 7, kind: output, shape index: {}]
  %s8 = sld [smem:[#allocation0]]
  $region77: #{tpu_custom_call.1} parent=0
    _
  %s10 = ssub.s32 1, %s8
  %s11 = scalar_select 0, %s10, %s8
  $region1: #{tpu_custom_call.1} parent=0
    #allocation2 [shape = 'u8[32768]{0}', space=vmem, size = 0x8000, scoped, tag = 'input window, operand 0']
    #allocation3 [shape = 's32[2]{0}', space=sflag, size = 0x8, scoped, tag = 'scoped memory for tpu_custom_call.1']
    #allocation4 [shape = 's32[2]{0}', space=sflag, size = 0x8, scoped, tag = 'scoped memory for tpu_custom_call.1']
    #allocation5 [shape = 'u8[65536]{0}', space=vmem, size = 0x10000, scoped, tag = 'input window, operand 1, single buffered']
    #allocation6 [shape = 's32[1]{0}', space=sflag, size = 0x4, scoped, tag = 'scoped memory for tpu_custom_call.1']
    #allocation7 [shape = 'u8[32768]{0}', space=vmem, size = 0x8000, scoped, tag = 'input window, operand 3, single buffered']
    #allocation8 [shape = 'u8[32768]{0}', space=vmem, size = 0x8000, scoped, tag = 'input window, operand 5, single buffered']
    #allocation9 [shape = 's32[1]{0}', space=sflag, size = 0x4, scoped, tag = 'scoped memory for tpu_custom_call.1']
    #allocation10 [shape = 'u8[16384]{0}', space=vmem, size = 0x4000, scoped, tag = 'output window, operand 0']
    %12 = vsyncpa [#allocation3], 0
    %s13 = scalar_lea.sflag [#allocation3], 1
    %14 = vsyncpa %s13, 0
    %15 = vsyncpa [#allocation6], 0
    %16 = vsyncpa [#allocation9], 0
    %17 = vsyncpa [#allocation4], 0
    %s18 = scalar_lea.sflag [#allocation4], 1
    %19 = vsyncpa %s18, 0
    loop: start=0, step=1, limit=6
    $region2: #{tpu_custom_call.1} parent=1 // loop_pre_header
      _
    $region3: #{tpu_custom_call.1} parent=1 // loop_header
      %s21 = sphi 0, %s25
      %p22 = scmp.ge.s32.totalorder %s21, 6
      %s31 = sphi 0, %s33
      %s34 = sphi 0, %s31
      %s35 = sphi 0, %s34
      %s51 = sphi 0, %s35
      %s55 = sphi 0, %s55
      %s57 = sphi 0, %s55
      %s58 = sphi 0, %s57
      %s72 = sphi 0, %s58
      %s76 = sphi 0, %s76
      %s78 = sphi 0, %s76
      %s79 = sphi 0, %s78
      %s93 = sphi 0, %s79
      %s97 = sphi 0, %s97
      %s99 = sphi 0, %s97
      %s100 = sphi 0, %s99
      %s114 = sphi 0, %s100
      %s118 = sphi 0, %s118
      %s120 = sphi 0, %s118
      %s121 = sphi 0, %s120
      %s135 = sphi 0, %s121
      %s139 = sphi 0, %s139
      %s141 = sphi 0, %s139
      %s142 = sphi 0, %s141
      %s156 = sphi 0, %s142
      %s160 = sphi 0, %s160
      %s162 = sphi 0, %s160
      %s163 = sphi 0, %s162
      %s177 = sphi 0, %s163
      %s183 = sphi 0, %s185
      %s186 = sphi 0, %s183
      %s187 = sphi 0, %s186
      %s203 = sphi 0, %s187
    $region4: #{tpu_custom_call.1} parent=1 // loop_header_branch
      %24 = sbr.rel (%p22) target = $region8
    $region5: #{tpu_custom_call.1} parent=1 // loop_body
      %s26 = ssub.s32 %s21, 1
      %s27 = ssub.s32 %s21, 2
      %s28 = sadd.s32 %s21, 1
      %s29 = ssub.s32 %s21, %s28
      %p30 = scmp.eq.s32.totalorder %s29, 0
      %s32 = sadd.s32 %s31, 1
      %s33 = scalar_select %p30, %s31, %s32
      %p36 = pneg %p30
      %p37 = scmp.eq.s32.totalorder %s21, 3
      %p38 = por %p36, %p37
      %p39 = scmp.ne.s32.totalorder %s31, %s34
      %p40 = scmp.eq.s32.totalorder %s21, 0
      %p41 = por %p39, %p40
      %p42 = scmp.ne.s32.totalorder %s31, %s34
      %p43 = scmp.eq.s32.totalorder %s26, 3
      %p44 = por %p42, %p43
      %p45 = scmp.ne.s32.totalorder %s34, %s35
      %p46 = scmp.eq.s32.totalorder %s26, 0
      %p47 = por %p45, %p46
      %p48 = scmp.ne.s32.totalorder %s34, %s35
      %p49 = scmp.eq.s32.totalorder %s27, 3
      %p50 = por %p48, %p49
      %p52 = scmp.ne.s32.totalorder %s35, %s51
      %p53 = scmp.eq.s32.totalorder %s27, 0
      %p54 = por %p52, %p53
      %s56 = sadd.s32 %s55, 1
      %p59 = scmp.eq.s32.totalorder %s21, 3
      %p60 = scmp.ne.s32.totalorder %s55, %s57
      %p61 = scmp.eq.s32.totalorder %s21, 0
      %p62 = por %p60, %p61
      %p63 = scmp.ne.s32.totalorder %s55, %s57
      %p64 = scmp.eq.s32.totalorder %s26, 3
      %p65 = por %p63, %p64
      %p66 = scmp.ne.s32.totalorder %s57, %s58
      %p67 = scmp.eq.s32.totalorder %s26, 0
      %p68 = por %p66, %p67
      %p69 = scmp.ne.s32.totalorder %s57, %s58
      %p70 = scmp.eq.s32.totalorder %s27, 3
      %p71 = por %p69, %p70
      %p73 = scmp.ne.s32.totalorder %s58, %s72
      %p74 = scmp.eq.s32.totalorder %s27, 0
      %p75 = por %p73, %p74
      %s77 = sadd.s32 %s76, 1
      %p80 = scmp.eq.s32.totalorder %s21, 3
      %p81 = scmp.ne.s32.totalorder %s76, %s78
      %p82 = scmp.eq.s32.totalorder %s21, 0
      %p83 = por %p81, %p82
      %p84 = scmp.ne.s32.totalorder %s76, %s78
      %p85 = scmp.eq.s32.totalorder %s26, 3
      %p86 = por %p84, %p85
      %p87 = scmp.ne.s32.totalorder %s78, %s79
      %p88 = scmp.eq.s32.totalorder %s26, 0
      %p89 = por %p87, %p88
      %p90 = scmp.ne.s32.totalorder %s78, %s79
      %p91 = scmp.eq.s32.totalorder %s27, 3
      %p92 = por %p90, %p91
      %p94 = scmp.ne.s32.totalorder %s79, %s93
      %p95 = scmp.eq.s32.totalorder %s27, 0
      %p96 = por %p94, %p95
      %s98 = sadd.s32 %s97, 1
      %p101 = scmp.eq.s32.totalorder %s21, 3
      %p102 = scmp.ne.s32.totalorder %s97, %s99
      %p103 = scmp.eq.s32.totalorder %s21, 0
      %p104 = por %p102, %p103
      %p105 = scmp.ne.s32.totalorder %s97, %s99
      %p106 = scmp.eq.s32.totalorder %s26, 3
      %p107 = por %p105, %p106
      %p108 = scmp.ne.s32.totalorder %s99, %s100
      %p109 = scmp.eq.s32.totalorder %s26, 0
      %p110 = por %p108, %p109
      %p111 = scmp.ne.s32.totalorder %s99, %s100
      %p112 = scmp.eq.s32.totalorder %s27, 3
      %p113 = por %p111, %p112
      %p115 = scmp.ne.s32.totalorder %s100, %s114
      %p116 = scmp.eq.s32.totalorder %s27, 0
      %p117 = por %p115, %p116
      %s119 = sadd.s32 %s118, 1
      %p122 = scmp.eq.s32.totalorder %s21, 3
      %p123 = scmp.ne.s32.totalorder %s118, %s120
      %p124 = scmp.eq.s32.totalorder %s21, 0
      %p125 = por %p123, %p124
      %p126 = scmp.ne.s32.totalorder %s118, %s120
      %p127 = scmp.eq.s32.totalorder %s26, 3
      %p128 = por %p126, %p127
      %p129 = scmp.ne.s32.totalorder %s120, %s121
      %p130 = scmp.eq.s32.totalorder %s26, 0
      %p131 = por %p129, %p130
      %p132 = scmp.ne.s32.totalorder %s120, %s121
      %p133 = scmp.eq.s32.totalorder %s27, 3
      %p134 = por %p132, %p133
      %p136 = scmp.ne.s32.totalorder %s121, %s135
      %p137 = scmp.eq.s32.totalorder %s27, 0
      %p138 = por %p136, %p137
      %s140 = sadd.s32 %s139, 1
      %p143 = scmp.eq.s32.totalorder %s21, 3
      %p144 = scmp.ne.s32.totalorder %s139, %s141
      %p145 = scmp.eq.s32.totalorder %s21, 0
      %p146 = por %p144, %p145
      %p147 = scmp.ne.s32.totalorder %s139, %s141
      %p148 = scmp.eq.s32.totalorder %s26, 3
      %p149 = por %p147, %p148
      %p150 = scmp.ne.s32.totalorder %s141, %s142
      %p151 = scmp.eq.s32.totalorder %s26, 0
      %p152 = por %p150, %p151
      %p153 = scmp.ne.s32.totalorder %s141, %s142
      %p154 = scmp.eq.s32.totalorder %s27, 3
      %p155 = por %p153, %p154
      %p157 = scmp.ne.s32.totalorder %s142, %s156
      %p158 = scmp.eq.s32.totalorder %s27, 0
      %p159 = por %p157, %p158
      %s161 = sadd.s32 %s160, 1
      %p164 = scmp.eq.s32.totalorder %s21, 3
      %p165 = scmp.ne.s32.totalorder %s160, %s162
      %p166 = scmp.eq.s32.totalorder %s21, 0
      %p167 = por %p165, %p166
      %p168 = scmp.ne.s32.totalorder %s160, %s162
      %p169 = scmp.eq.s32.totalorder %s26, 3
      %p170 = por %p168, %p169
      %p171 = scmp.ne.s32.totalorder %s162, %s163
      %p172 = scmp.eq.s32.totalorder %s26, 0
      %p173 = por %p171, %p172
      %p174 = scmp.ne.s32.totalorder %s162, %s163
      %p175 = scmp.eq.s32.totalorder %s27, 3
      %p176 = por %p174, %p175
      %p178 = scmp.ne.s32.totalorder %s163, %s177
      %p179 = scmp.eq.s32.totalorder %s27, 0
      %p180 = por %p178, %p179
      %s181 = ssub.s32 %s21, %s28
      %p182 = scmp.eq.s32.totalorder %s181, 0
      %s184 = sadd.s32 %s183, 1
      %s185 = scalar_select %p182, %s183, %s184
      %p188 = pneg %p182
      %p189 = scmp.eq.s32.totalorder %s21, 3
      %p190 = por %p188, %p189
      %p191 = scmp.ne.s32.totalorder %s183, %s186
      %p192 = scmp.eq.s32.totalorder %s21, 0
      %p193 = por %p191, %p192
      %p194 = scmp.ne.s32.totalorder %s183, %s186
      %p195 = scmp.eq.s32.totalorder %s26, 3
      %p196 = por %p194, %p195
      %p197 = scmp.ne.s32.totalorder %s186, %s187
      %p198 = scmp.eq.s32.totalorder %s26, 0
      %p199 = por %p197, %p198
      %p200 = scmp.ne.s32.totalorder %s186, %s187
      %p201 = scmp.eq.s32.totalorder %s27, 3
      %p202 = por %p200, %p201
      %p204 = scmp.ne.s32.totalorder %s187, %s203
      %p205 = scmp.eq.s32.totalorder %s27, 0
      %p206 = por %p204, %p205
      %p207 = scmp.le.s32.totalorder 1, %s21
      %p208 = scmp.lt.s32.totalorder %s21, 5
      %p209 = pnand %p207, %p208
      %p210 = pneg %p209
      // Predicated region
      $region9: #{tpu_custom_call.1} parent=5 // pred_check
        _
      $region10: #{tpu_custom_call.1} parent=5 // pred_check_branch
        %212 = sbr.rel (%p209) target = $region12
      $region11: #{tpu_custom_call.1} parent=5 // pred_region
        %s213 = ssub.s32 %s21, 1
        // Predicated region
        $region13: #{tpu_custom_call.1} parent=11 // pred_check
          %p214 = pneg %p68
        $region14: #{tpu_custom_call.1} parent=11 // pred_check_branch
          %216 = sbr.rel (%p214) target = $region16
        $region15: #{tpu_custom_call.1} parent=11 // pred_region
          %s218 = ssub.s32 2048, 2048
          %219 = vsyncadd [#allocation6], %s218
          %s220 = sshll.u32 [#allocation5], 4
          %s221 = int_to_ptr.vmem [resolvable:$true] %s220
          %226 = dma.hbm_to_vmem [thread:$0]  %s1, 2048, %s221, [#allocation6], 64, 64, 4
        $region16: #{tpu_custom_call.1} parent=11 // pred_fallthru
          _
        // Predicated region
        $region17: #{tpu_custom_call.1} parent=11 // pred_check
          %p227 = pneg %p89
        $region18: #{tpu_custom_call.1} parent=11 // pred_check_branch
          %229 = sbr.rel (%p227) target = $region20
        $region19: #{tpu_custom_call.1} parent=11 // pred_region
          _
        $region20: #{tpu_custom_call.1} parent=11 // pred_fallthru
          _
        // Predicated region
        $region21: #{tpu_custom_call.1} parent=11 // pred_check
          %p230 = pneg %p110
        $region22: #{tpu_custom_call.1} parent=11 // pred_check_branch
          %232 = sbr.rel (%p230) target = $region24
        $region23: #{tpu_custom_call.1} parent=11 // pred_region
          %s234 = ssub.s32 1024, 1024
          %235 = vsyncadd [#allocation6], %s234
          %s236 = sshll.u32 [#allocation7], 4
          %s237 = int_to_ptr.vmem [resolvable:$true] %s236
          %242 = dma.hbm_to_vmem [thread:$0]  %s3, 1024, %s237, [#allocation6], 64, 64, 4
        $region24: #{tpu_custom_call.1} parent=11 // pred_fallthru
          _
        // Predicated region
        $region25: #{tpu_custom_call.1} parent=11 // pred_check
          %p243 = pneg %p131
        $region26: #{tpu_custom_call.1} parent=11 // pred_check_branch
          %245 = sbr.rel (%p243) target = $region28
        $region27: #{tpu_custom_call.1} parent=11 // pred_region
          _
        $region28: #{tpu_custom_call.1} parent=11 // pred_fallthru
          _
        // Predicated region
        $region29: #{tpu_custom_call.1} parent=11 // pred_check
          %p246 = pneg %p152
        $region30: #{tpu_custom_call.1} parent=11 // pred_check_branch
          %248 = sbr.rel (%p246) target = $region32
        $region31: #{tpu_custom_call.1} parent=11 // pred_region
          %s250 = ssub.s32 1024, 1024
          %251 = vsyncadd [#allocation9], %s250
          %s252 = sshll.u32 [#allocation8], 4
          %s253 = int_to_ptr.vmem [resolvable:$true] %s252
          %258 = dma.hbm_to_vmem [thread:$0]  %s5, 1024, %s253, [#allocation9], 64, 64, 4
        $region32: #{tpu_custom_call.1} parent=11 // pred_fallthru
          _
        // Predicated region
        $region33: #{tpu_custom_call.1} parent=11 // pred_check
          %p259 = pneg %p173
        $region34: #{tpu_custom_call.1} parent=11 // pred_check_branch
          %261 = sbr.rel (%p259) target = $region36
        $region35: #{tpu_custom_call.1} parent=11 // pred_region
          _
        $region36: #{tpu_custom_call.1} parent=11 // pred_fallthru
          _
      $region12: #{tpu_custom_call.1} parent=5 // pred_fallthru
        _
      %p262 = scmp.lt.s32.totalorder %s21, 4
      // Predicated region
      $region37: #{tpu_custom_call.1} parent=5 // pred_check
        %p263 = pneg %p262
      $region38: #{tpu_custom_call.1} parent=5 // pred_check_branch
        %265 = sbr.rel (%p263) target = $region40
      $region39: #{tpu_custom_call.1} parent=5 // pred_region
        // Predicated region
        $region41: #{tpu_custom_call.1} parent=39 // pred_check
          %p266 = pneg %p41
        $region42: #{tpu_custom_call.1} parent=39 // pred_check_branch
          %268 = sbr.rel (%p266) target = $region44
        $region43: #{tpu_custom_call.1} parent=39 // pred_region
          %s269 = sand.u32 %s31, 1
          %s270 = scalar_lea.sflag [#allocation3], %s269
          %s271 = sand.u32 %s31, 1
          %s272 = smul.addr %s271, 32
          %s273 = scalar_lea.vmem [#allocation2], %s272
          %s274 = smul.u32 2, %s21
          %s276 = ssub.s32 512, 512
          %277 = vsyncadd %s270, %s276
          %s278 = smul.addr %s274, 2
          %s279 = smul.addr %s278, 128
          %s280 = scalar_lea.hbm %s0, %s279
          %s281 = sshll.u32 %s273, 4
          %s282 = int_to_ptr.vmem [resolvable:$true] %s281
          %287 = dma.hbm_to_vmem [thread:$0]  %s280, 512, %s282, %s270, 256, 256, 16
        $region44: #{tpu_custom_call.1} parent=39 // pred_fallthru
          _
      $region40: #{tpu_custom_call.1} parent=5 // pred_fallthru
        _
      %p288 = scmp.le.s32.totalorder 1, %s21
      %p289 = scmp.lt.s32.totalorder %s21, 5
      %p290 = pnand %p288, %p289
      %p291 = pneg %p290
      // Predicated region
      $region45: #{tpu_custom_call.1} parent=5 // pred_check
        _
      $region46: #{tpu_custom_call.1} parent=5 // pred_check_branch
        %293 = sbr.rel (%p290) target = $region48
      $region47: #{tpu_custom_call.1} parent=5 // pred_region
        %s294 = ssub.s32 %s21, 1
        %s295 = sand.u32 %s34, 1
        %s296 = scalar_lea.sflag [#allocation3], %s295
        %s297 = sand.u32 %s34, 1
        %s298 = smul.addr %s297, 32
        %s299 = scalar_lea.vmem [#allocation2], %s298
        // Predicated region
        $region49: #{tpu_custom_call.1} parent=47 // pred_check
          %p300 = pneg %p47
        $region50: #{tpu_custom_call.1} parent=47 // pred_check_branch
          %302 = sbr.rel (%p300) target = $region52
        $region51: #{tpu_custom_call.1} parent=47 // pred_region
          %303 = dma.done %s296, 512
        $region52: #{tpu_custom_call.1} parent=47 // pred_fallthru
          _
        // Predicated region
        $region53: #{tpu_custom_call.1} parent=47 // pred_check
          %p304 = pneg %p68
        $region54: #{tpu_custom_call.1} parent=47 // pred_check_branch
          %306 = sbr.rel (%p304) target = $region56
        $region55: #{tpu_custom_call.1} parent=47 // pred_region
          %307 = dma.done [#allocation6], 2048
        $region56: #{tpu_custom_call.1} parent=47 // pred_fallthru
          _
        // Predicated region
        $region57: #{tpu_custom_call.1} parent=47 // pred_check
          %p308 = pneg %p110
        $region58: #{tpu_custom_call.1} parent=47 // pred_check_branch
          %310 = sbr.rel (%p308) target = $region60
        $region59: #{tpu_custom_call.1} parent=47 // pred_region
          %311 = dma.done [#allocation6], 1024
        $region60: #{tpu_custom_call.1} parent=47 // pred_fallthru
          _
        // Predicated region
        $region61: #{tpu_custom_call.1} parent=47 // pred_check
          %p312 = pneg %p152
        $region62: #{tpu_custom_call.1} parent=47 // pred_check_branch
          %314 = sbr.rel (%p312) target = $region64
        $region63: #{tpu_custom_call.1} parent=47 // pred_region
          %315 = dma.done [#allocation9], 1024
        $region64: #{tpu_custom_call.1} parent=47 // pred_fallthru
          _
        %s316 = sand.u32 %s34, 1
        %s317 = scalar_lea.sflag [#allocation3], %s316
        %s318 = sand.u32 %s34, 1
        %s319 = smul.addr %s318, 32
        %s320 = scalar_lea.vmem [#allocation2], %s319
        %p321 = pneg %p47
        %p322 = pneg %p44
        %p323 = pneg %p68
        %p324 = pneg %p65
        %p325 = pneg %p89
        %p326 = pneg %p86
        %p327 = pneg %p110
        %p328 = pneg %p107
        %p329 = pneg %p131
        %p330 = pneg %p128
        %p331 = pneg %p152
        %p332 = pneg %p149
        %p333 = pneg %p173
        %p334 = pneg %p170
        %p335 = pneg %p199
        %p336 = pneg %p196
        %s337 = sand.u32 %s186, 1
        %s338 = scalar_lea.sflag [#allocation4], %s337
        %s339 = sand.u32 %s186, 1
        %s340 = smul.addr %s339, 16
        %s341 = scalar_lea.vmem [#allocation10], %s340
        %s342 = smul.u32 2, %s26
        %s343 = smul.u32 2, %s26
        %v345 = vld [vmem:[%s299] sm:$0xff]
        %v346 = vld [vmem:[%s299 + $0x8] sm:$0xff]
        %v347 = vld [vmem:[%s299 + $0x10] sm:$0xff]
        %v348 = vld [vmem:[%s299 + $0x18] sm:$0xff]
        %v349 = vpack.c.bf16 %v347, %v345
        %v350 = vpack.c.bf16 %v348, %v346
        %v351 = vld [vmem:[#allocation5] sm:$0xf]
        %v352 = vld [vmem:[#allocation5 + $0x4] sm:$0xf]
        %v353 = vld [vmem:[#allocation5 + $0x8] sm:$0xf]
        %v354 = vld [vmem:[#allocation5 + $0xc] sm:$0xf]
        %v355 = vld [vmem:[#allocation5 + $0x10] sm:$0xf]
        %v356 = vld [vmem:[#allocation5 + $0x14] sm:$0xf]
        %v357 = vld [vmem:[#allocation5 + $0x18] sm:$0xf]
        %v358 = vld [vmem:[#allocation5 + $0x1c] sm:$0xf]
        %v359 = vld [vmem:[#allocation5 + $0x20] sm:$0xf]
        %v360 = vld [vmem:[#allocation5 + $0x24] sm:$0xf]
        %v361 = vld [vmem:[#allocation5 + $0x28] sm:$0xf]
        %v362 = vld [vmem:[#allocation5 + $0x2c] sm:$0xf]
        %v363 = vld [vmem:[#allocation5 + $0x30] sm:$0xf]
        %v364 = vld [vmem:[#allocation5 + $0x34] sm:$0xf]
        %v365 = vld [vmem:[#allocation5 + $0x38] sm:$0xf]
        %v366 = vld [vmem:[#allocation5 + $0x3c] sm:$0xf]
        %v367 = vld [vmem:[#allocation5 + $0x40] sm:$0xf]
        %v368 = vld [vmem:[#allocation5 + $0x44] sm:$0xf]
        %v369 = vld [vmem:[#allocation5 + $0x48] sm:$0xf]
        %v370 = vld [vmem:[#allocation5 + $0x4c] sm:$0xf]
        %v371 = vld [vmem:[#allocation5 + $0x50] sm:$0xf]
        %v372 = vld [vmem:[#allocation5 + $0x54] sm:$0xf]
        %v373 = vld [vmem:[#allocation5 + $0x58] sm:$0xf]
        %v374 = vld [vmem:[#allocation5 + $0x5c] sm:$0xf]
        %v375 = vld [vmem:[#allocation5 + $0x60] sm:$0xf]
        %v376 = vld [vmem:[#allocation5 + $0x64] sm:$0xf]
        %v377 = vld [vmem:[#allocation5 + $0x68] sm:$0xf]
        %v378 = vld [vmem:[#allocation5 + $0x6c] sm:$0xf]
        %v379 = vld [vmem:[#allocation5 + $0x70] sm:$0xf]
        %v380 = vld [vmem:[#allocation5 + $0x74] sm:$0xf]
        %v381 = vld [vmem:[#allocation5 + $0x78] sm:$0xf]
        %v382 = vld [vmem:[#allocation5 + $0x7c] sm:$0xf]
        %v383 = vld [vmem:[%s2] sm:$0x1]
        %v385 = vlaneseq
        %v386 = vshrl.u32 %v385, 7
        %v387 = vsub.s32 0, %v386
        %v388 = vrot.slane %v383, %v387
        %v422 = vunpack.c.l.b16 %v351
        %v423 = vunpack.c.l.b16 %v352
        %v424 = vunpack.c.l.b16 %v353
        %v425 = vunpack.c.l.b16 %v354
        %v426 = vunpack.c.l.b16 %v355
        %v427 = vunpack.c.l.b16 %v356
        %v428 = vunpack.c.l.b16 %v357
        %v429 = vunpack.c.l.b16 %v358
        %v430 = vunpack.c.l.b16 %v359
        %v431 = vunpack.c.l.b16 %v360
        %v432 = vunpack.c.l.b16 %v361
        %v433 = vunpack.c.l.b16 %v362
        %v434 = vunpack.c.l.b16 %v363
        %v435 = vunpack.c.l.b16 %v364
        %v436 = vunpack.c.l.b16 %v365
        %v437 = vunpack.c.l.b16 %v366
        %v438 = vunpack.c.l.b16 %v367
        %v439 = vunpack.c.l.b16 %v368
        %v440 = vunpack.c.l.b16 %v369
        %v441 = vunpack.c.l.b16 %v370
        %v442 = vunpack.c.l.b16 %v371
        %v443 = vunpack.c.l.b16 %v372
        %v444 = vunpack.c.l.b16 %v373
        %v445 = vunpack.c.l.b16 %v374
        %v446 = vunpack.c.l.b16 %v375
        %v447 = vunpack.c.l.b16 %v376
        %v448 = vunpack.c.l.b16 %v377
        %v449 = vunpack.c.l.b16 %v378
        %v450 = vunpack.c.l.b16 %v379
        %v451 = vunpack.c.l.b16 %v380
        %v452 = vunpack.c.l.b16 %v381
        %v453 = vunpack.c.l.b16 %v382
        %v454 = vpack.c.b16 %v423, %v422
        %v455 = vpack.c.b16 %v425, %v424
        %v456 = vpack.c.b16 %v427, %v426
        %v457 = vpack.c.b16 %v429, %v428
        %v458 = vpack.c.b16 %v431, %v430
        %v459 = vpack.c.b16 %v433, %v432
        %v460 = vpack.c.b16 %v435, %v434
        %v461 = vpack.c.b16 %v437, %v436
        %v462 = vpack.c.b16 %v439, %v438
        %v463 = vpack.c.b16 %v441, %v440
        %v464 = vpack.c.b16 %v443, %v442
        %v465 = vpack.c.b16 %v445, %v444
        %v466 = vpack.c.b16 %v447, %v446
        %v467 = vpack.c.b16 %v449, %v448
        %v468 = vpack.c.b16 %v451, %v450
        %v469 = vpack.c.b16 %v453, %v452
        %486 = vmatprep.subr.bf16.mxu0 0
        %487 = vmatpush1.bf16.msra.mxu0 %v461
        %488 = vmatprep.subr.bf16.mxu0 0
        %489 = vmatpush1.bf16.msra.mxu0 %v460
        %490 = vmatprep.subr.bf16.mxu0 0
        %491 = vmatpush1.bf16.msra.mxu0 %v459
        %492 = vmatprep.subr.bf16.mxu0 0
        %493 = vmatpush1.bf16.msra.mxu0 %v458
        %494 = vmatprep.subr.bf16.mxu0 0
        %495 = vmatpush1.bf16.msra.mxu0 %v457
        %496 = vmatprep.subr.bf16.mxu0 0
        %497 = vmatpush1.bf16.msra.mxu0 %v456
        %498 = vmatprep.subr.bf16.mxu0 0
        %499 = vmatpush1.bf16.msra.mxu0 %v455
        %500 = vmatprep.subr.bf16.mxu0 0
        %501 = vmatpush1.bf16.msra.mxu0 %v454
        %502 = vmatprep.subr.bf16.mxu0 0
        %503 = vmatpush2.bf16.msra.mxu0 %v469
        %504 = vmatprep.subr.bf16.mxu0 0
        %505 = vmatpush2.bf16.msra.mxu0 %v468
        %506 = vmatprep.subr.bf16.mxu0 0
        %507 = vmatpush2.bf16.msra.mxu0 %v467
        %508 = vmatprep.subr.bf16.mxu0 0
        %509 = vmatpush2.bf16.msra.mxu0 %v466
        %510 = vmatprep.subr.bf16.mxu0 0
        %511 = vmatpush2.bf16.msra.mxu0 %v465
        %512 = vmatprep.subr.bf16.mxu0 0
        %513 = vmatpush2.bf16.msra.mxu0 %v464
        %514 = vmatprep.subr.bf16.mxu0 0
        %515 = vmatpush2.bf16.msra.mxu0 %v463
        %516 = vmatprep.subr.bf16.mxu0 0
        %517 = vmatpush2.bf16.msra.mxu0 %v462
        %518 = vmatprep.mubr.bf16.mxu0 %v350
        %519 = vmatmul.mubr.bf16.gmra.mxu0 %v349
        %v520 = vpop.f32.mrf.mxu0
        %v521 = vadd.f32 %v388, %v520
        %v522 = vpop.f32.mrf.mxu0
        %v523 = vpop.f32.mrf.mxu0
        %v524 = vadd.f32 %v388, %v523
        %v525 = vpop.f32.mrf.mxu0
        %526 = vdwg.mxu0
        %v527 = vmax.f32 %v521, 0.0
        %v528 = vmax.f32 %v524, 0.0
        %v529 = vpack.c.bf16 %v528, %v527
        %v530 = vld [vmem:[#allocation7] sm:$0xf]
        %v531 = vld [vmem:[#allocation7 + $0x4] sm:$0xf]
        %v532 = vld [vmem:[#allocation7 + $0x8] sm:$0xf]
        %v533 = vld [vmem:[#allocation7 + $0xc] sm:$0xf]
        %v534 = vld [vmem:[#allocation7 + $0x10] sm:$0xf]
        %v535 = vld [vmem:[#allocation7 + $0x14] sm:$0xf]
        %v536 = vld [vmem:[#allocation7 + $0x18] sm:$0xf]
        %v537 = vld [vmem:[#allocation7 + $0x1c] sm:$0xf]
        %v538 = vld [vmem:[#allocation7 + $0x20] sm:$0xf]
        %v539 = vld [vmem:[#allocation7 + $0x24] sm:$0xf]
        %v540 = vld [vmem:[#allocation7 + $0x28] sm:$0xf]
        %v541 = vld [vmem:[#allocation7 + $0x2c] sm:$0xf]
        %v542 = vld [vmem:[#allocation7 + $0x30] sm:$0xf]
        %v543 = vld [vmem:[#allocation7 + $0x34] sm:$0xf]
        %v544 = vld [vmem:[#allocation7 + $0x38] sm:$0xf]
        %v545 = vld [vmem:[#allocation7 + $0x3c] sm:$0xf]
        %v546 = vld [vmem:[%s4] sm:$0x1]
        %v548 = vlaneseq
        %v549 = vshrl.u32 %v548, 7
        %v550 = vsub.s32 0, %v549
        %v551 = vrot.slane %v546, %v550
        %v569 = vunpack.c.l.b16 %v530
        %v570 = vunpack.c.l.b16 %v531
        %v571 = vunpack.c.l.b16 %v532
        %v572 = vunpack.c.l.b16 %v533
        %v573 = vunpack.c.l.b16 %v534
        %v574 = vunpack.c.l.b16 %v535
        %v575 = vunpack.c.l.b16 %v536
        %v576 = vunpack.c.l.b16 %v537
        %v577 = vunpack.c.l.b16 %v538
        %v578 = vunpack.c.l.b16 %v539
        %v579 = vunpack.c.l.b16 %v540
        %v580 = vunpack.c.l.b16 %v541
        %v581 = vunpack.c.l.b16 %v542
        %v582 = vunpack.c.l.b16 %v543
        %v583 = vunpack.c.l.b16 %v544
        %v584 = vunpack.c.l.b16 %v545
        %v585 = vpack.c.b16 %v570, %v569
        %v586 = vpack.c.b16 %v572, %v571
        %v587 = vpack.c.b16 %v574, %v573
        %v588 = vpack.c.b16 %v576, %v575
        %v589 = vpack.c.b16 %v578, %v577
        %v590 = vpack.c.b16 %v580, %v579
        %v591 = vpack.c.b16 %v582, %v581
        %v592 = vpack.c.b16 %v584, %v583
        %601 = vmatprep.subr.bf16.mxu0 0
        %602 = vmatpush1.bf16.msra.mxu0 %v592
        %603 = vmatprep.subr.bf16.mxu0 0
        %604 = vmatpush1.bf16.msra.mxu0 %v591
        %605 = vmatprep.subr.bf16.mxu0 0
        %606 = vmatpush1.bf16.msra.mxu0 %v590
        %607 = vmatprep.subr.bf16.mxu0 0
        %608 = vmatpush1.bf16.msra.mxu0 %v589
        %609 = vmatprep.subr.bf16.mxu0 0
        %610 = vmatpush1.bf16.msra.mxu0 %v588
        %611 = vmatprep.subr.bf16.mxu0 0
        %612 = vmatpush1.bf16.msra.mxu0 %v587
        %613 = vmatprep.subr.bf16.mxu0 0
        %614 = vmatpush1.bf16.msra.mxu0 %v586
        %615 = vmatprep.subr.bf16.mxu0 0
        %616 = vmatpush1.bf16.msra.mxu0 %v585
        %617 = vmatprep.subr.bf16.mxu0 0
        %618 = vmatpush2.bf16.msra.mxu0 0
        %619 = vmatprep.subr.bf16.mxu0 0
        %620 = vmatpush2.bf16.msra.mxu0 0
        %621 = vmatprep.subr.bf16.mxu0 0
        %622 = vmatpush2.bf16.msra.mxu0 0
        %623 = vmatprep.subr.bf16.mxu0 0
        %624 = vmatpush2.bf16.msra.mxu0 0
        %625 = vmatprep.subr.bf16.mxu0 0
        %626 = vmatpush2.bf16.msra.mxu0 0
        %627 = vmatprep.subr.bf16.mxu0 0
        %628 = vmatpush2.bf16.msra.mxu0 0
        %629 = vmatprep.subr.bf16.mxu0 0
        %630 = vmatpush2.bf16.msra.mxu0 0
        %631 = vmatprep.subr.bf16.mxu0 0
        %632 = vmatpush2.bf16.msra.mxu0 0
        %633 = vmatprep.mubr.bf16.mxu0 0
        %634 = vmatmul.mubr.bf16.gmra.mxu0 %v529
        %v635 = vpop.f32.mrf.mxu0
        %v636 = vadd.f32 %v551, %v635
        %v637 = vpop.f32.mrf.mxu0
        %v638 = vpop.f32.mrf.mxu0
        %v639 = vadd.f32 %v551, %v638
        %v640 = vpop.f32.mrf.mxu0
        %641 = vdwg.mxu0
        %v642 = vmax.f32 %v636, 0.0
        %v643 = vmax.f32 %v639, 0.0
        %v644 = vpack.c.bf16 %v643, %v642
        %v645 = vld [vmem:[#allocation8] sm:$0xf]
        %v646 = vld [vmem:[#allocation8 + $0x4] sm:$0xf]
        %v647 = vld [vmem:[#allocation8 + $0x8] sm:$0xf]
        %v648 = vld [vmem:[#allocation8 + $0xc] sm:$0xf]
        %v649 = vld [vmem:[#allocation8 + $0x10] sm:$0xf]
        %v650 = vld [vmem:[#allocation8 + $0x14] sm:$0xf]
        %v651 = vld [vmem:[#allocation8 + $0x18] sm:$0xf]
        %v652 = vld [vmem:[#allocation8 + $0x1c] sm:$0xf]
        %v653 = vld [vmem:[#allocation8 + $0x20] sm:$0xf]
        %v654 = vld [vmem:[#allocation8 + $0x24] sm:$0xf]
        %v655 = vld [vmem:[#allocation8 + $0x28] sm:$0xf]
        %v656 = vld [vmem:[#allocation8 + $0x2c] sm:$0xf]
        %v657 = vld [vmem:[#allocation8 + $0x30] sm:$0xf]
        %v658 = vld [vmem:[#allocation8 + $0x34] sm:$0xf]
        %v659 = vld [vmem:[#allocation8 + $0x38] sm:$0xf]
        %v660 = vld [vmem:[#allocation8 + $0x3c] sm:$0xf]
        %v661 = vld [vmem:[%s6] sm:$0x1]
        %v663 = vlaneseq
        %v664 = vshrl.u32 %v663, 7
        %v665 = vsub.s32 0, %v664
        %v666 = vrot.slane %v661, %v665
        %v684 = vunpack.c.l.b16 %v645
        %v685 = vunpack.c.l.b16 %v646
        %v686 = vunpack.c.l.b16 %v647
        %v687 = vunpack.c.l.b16 %v648
        %v688 = vunpack.c.l.b16 %v649
        %v689 = vunpack.c.l.b16 %v650
        %v690 = vunpack.c.l.b16 %v651
        %v691 = vunpack.c.l.b16 %v652
        %v692 = vunpack.c.l.b16 %v653
        %v693 = vunpack.c.l.b16 %v654
        %v694 = vunpack.c.l.b16 %v655
        %v695 = vunpack.c.l.b16 %v656
        %v696 = vunpack.c.l.b16 %v657
        %v697 = vunpack.c.l.b16 %v658
        %v698 = vunpack.c.l.b16 %v659
        %v699 = vunpack.c.l.b16 %v660
        %v700 = vpack.c.b16 %v685, %v684
        %v701 = vpack.c.b16 %v687, %v686
        %v702 = vpack.c.b16 %v689, %v688
        %v703 = vpack.c.b16 %v691, %v690
        %v704 = vpack.c.b16 %v693, %v692
        %v705 = vpack.c.b16 %v695, %v694
        %v706 = vpack.c.b16 %v697, %v696
        %v707 = vpack.c.b16 %v699, %v698
        %716 = vmatprep.subr.bf16.mxu0 0
        %717 = vmatpush1.bf16.msra.mxu0 %v707
        %718 = vmatprep.subr.bf16.mxu0 0
        %719 = vmatpush1.bf16.msra.mxu0 %v706
        %720 = vmatprep.subr.bf16.mxu0 0
        %721 = vmatpush1.bf16.msra.mxu0 %v705
        %722 = vmatprep.subr.bf16.mxu0 0
        %723 = vmatpush1.bf16.msra.mxu0 %v704
        %724 = vmatprep.subr.bf16.mxu0 0
        %725 = vmatpush1.bf16.msra.mxu0 %v703
        %726 = vmatprep.subr.bf16.mxu0 0
        %727 = vmatpush1.bf16.msra.mxu0 %v702
        %728 = vmatprep.subr.bf16.mxu0 0
        %729 = vmatpush1.bf16.msra.mxu0 %v701
        %730 = vmatprep.subr.bf16.mxu0 0
        %731 = vmatpush1.bf16.msra.mxu0 %v700
        %732 = vmatprep.subr.bf16.mxu0 0
        %733 = vmatpush2.bf16.msra.mxu0 0
        %734 = vmatprep.subr.bf16.mxu0 0
        %735 = vmatpush2.bf16.msra.mxu0 0
        %736 = vmatprep.subr.bf16.mxu0 0
        %737 = vmatpush2.bf16.msra.mxu0 0
        %738 = vmatprep.subr.bf16.mxu0 0
        %739 = vmatpush2.bf16.msra.mxu0 0
        %740 = vmatprep.subr.bf16.mxu0 0
        %741 = vmatpush2.bf16.msra.mxu0 0
        %742 = vmatprep.subr.bf16.mxu0 0
        %743 = vmatpush2.bf16.msra.mxu0 0
        %744 = vmatprep.subr.bf16.mxu0 0
        %745 = vmatpush2.bf16.msra.mxu0 0
        %746 = vmatprep.subr.bf16.mxu0 0
        %747 = vmatpush2.bf16.msra.mxu0 0
        %748 = vmatprep.mubr.bf16.mxu0 0
        %749 = vmatmul.mubr.bf16.gmra.mxu0 %v644
        %v750 = vpop.f32.mrf.mxu0
        %v751 = vadd.f32 %v666, %v750
        %v752 = vpop.f32.mrf.mxu0
        %v753 = vpop.f32.mrf.mxu0
        %v754 = vadd.f32 %v666, %v753
        %v755 = vpop.f32.mrf.mxu0
        %756 = vdwg.mxu0
        %757 = vst [vmem:[%s341] sm:$0xff] %v751
        %758 = vst [vmem:[%s341 + $0x8] sm:$0xff] %v754
        %s759 = sand.u32 %s186, 1
        %s760 = scalar_lea.sflag [#allocation4], %s759
        %s761 = sand.u32 %s186, 1
        %s762 = smul.addr %s761, 16
        %s763 = scalar_lea.vmem [#allocation10], %s762
        // Predicated region
        $region65: #{tpu_custom_call.1} parent=47 // pred_check
          %p764 = pneg %p196
        $region66: #{tpu_custom_call.1} parent=47 // pred_check_branch
          %766 = sbr.rel (%p764) target = $region68
        $region67: #{tpu_custom_call.1} parent=47 // pred_region
          %s767 = smul.u32 2, %s26
          %s769 = ssub.s32 256, 256
          %770 = vsyncadd %s760, %s769
          %s771 = smul.addr %s767, 128
          %s772 = scalar_lea.hbm %s7, %s771
          %s773 = sshll.u32 %s763, 4
          %s774 = int_to_ptr.vmem [resolvable:$true] %s773
          %779 = dma.vmem_to_hbm [thread:$0]  %s774, 256, %s772, %s760, 128, 128, 8
        $region68: #{tpu_custom_call.1} parent=47 // pred_fallthru
          _
      $region48: #{tpu_custom_call.1} parent=5 // pred_fallthru
        _
      %p780 = scmp.le.s32.totalorder 2, %s21
      // Predicated region
      $region69: #{tpu_custom_call.1} parent=5 // pred_check
        %p781 = pneg %p780
      $region70: #{tpu_custom_call.1} parent=5 // pred_check_branch
        %783 = sbr.rel (%p781) target = $region72
      $region71: #{tpu_custom_call.1} parent=5 // pred_region
        %s784 = ssub.s32 %s21, 2
        // Predicated region
        $region73: #{tpu_custom_call.1} parent=71 // pred_check
          %p785 = pneg %p202
        $region74: #{tpu_custom_call.1} parent=71 // pred_check_branch
          %787 = sbr.rel (%p785) target = $region76
        $region75: #{tpu_custom_call.1} parent=71 // pred_region
          %s788 = sand.u32 %s187, 1
          %s789 = scalar_lea.sflag [#allocation4], %s788
          %s790 = sand.u32 %s187, 1
          %s791 = smul.addr %s790, 16
          %s792 = scalar_lea.vmem [#allocation10], %s791
          %793 = dma.done %s789, 256
        $region76: #{tpu_custom_call.1} parent=71 // pred_fallthru
          _
      $region72: #{tpu_custom_call.1} parent=5 // pred_fallthru
        _
    $region6: #{tpu_custom_call.1} parent=1 // loop_footer
      %s25 = sadd.s32 1, %s21
    $region7: #{tpu_custom_call.1} parent=1 // loop_footer_branch
      %20 = sbr.rel target = $region3
    $region8: #{tpu_custom_call.1} parent=1 // loop_exit
      _
    %794 = vsyncpa [#allocation3], 1
    %s795 = scalar_lea.sflag [#allocation3], 1
    %796 = vsyncpa %s795, 1
    %797 = vsyncpa [#allocation6], 1
    %798 = vsyncpa [#allocation9], 1
    %799 = vsyncpa [#allocation4], 1
    %s800 = scalar_lea.sflag [#allocation4], 1
    %801 = vsyncpa %s800, 1

</llo_original>
